<compile_context>
chip_gen: v6e
topology: v6e:2x2x1
jax: 0.10.0
libtpu: 0.0.40
codegen_flags: <defaults>
</compile_context>

<pallas_src>
import jax
import jax.numpy as jnp
from jax.experimental import pallas as pl
from jax.experimental.pallas import tpu as pltpu


def _identity_kernel(x_ref, o_ref):
    # Identity forward: out = x.
    o_ref[...] = x_ref[...]


# Per-block VMEM budget for the streaming path: 2 MiB/block means
# 2 arrays x 2 pipeline buffers = 8 MiB of VMEM, safe on every generation.
_BLOCK_BYTES = 2 * 1024 * 1024
# At or below this total size, do one un-blocked whole-array call instead.
_SMALL_TOTAL_BYTES = 2 * 1024 * 1024


def dummy_transformer_block(x, *, small_total_bytes=_SMALL_TOTAL_BYTES,
                            block_bytes=_BLOCK_BYTES):
    """Pallas implementation of DummyTransformerBlock.forward (identity)."""
    orig_shape = x.shape
    if x.ndim == 0:
        return x  # degenerate scalar: nothing to tile

    # Lane-dense 2D view: collapse leading dims, keep last dim on the lane axis.
    cols = orig_shape[-1]
    rows = 1
    for d in orig_shape[:-1]:
        rows *= d
    x2d = jnp.reshape(x, (rows, cols))

    itemsize = x.dtype.itemsize
    total_bytes = rows * cols * itemsize

    if total_bytes <= small_total_bytes:
        # Single un-blocked invocation: whole array resident in VMEM,
        # output aliased onto the input buffer.
        out2d = pl.pallas_call(
            _identity_kernel,
            out_shape=jax.ShapeDtypeStruct((rows, cols), x.dtype),
            input_output_aliases={0: 0},
        )(x2d)
        return jnp.reshape(out2d, orig_shape)

    # Streaming path: 1-D grid over lane-dense (block_rows, cols) row blocks.
    # block_rows is a multiple of 8 (sublane) and bounded by the VMEM budget.
    row_bytes = max(cols * itemsize, 1)
    block_rows = max(8, min(rows, (block_bytes // row_bytes) // 8 * 8))
    if block_rows >= rows:
        block_rows = rows  # full extent: no (8,128) divisibility requirement
    grid = (pl.cdiv(rows, block_rows),)

    out2d = pl.pallas_call(
        _identity_kernel,
        out_shape=jax.ShapeDtypeStruct((rows, cols), x.dtype),
        grid_spec=pltpu.PrefetchScalarGridSpec(
            num_scalar_prefetch=0,
            grid=grid,
            in_specs=[pl.BlockSpec((block_rows, cols), lambda i: (i, 0))],
            out_specs=pl.BlockSpec((block_rows, cols), lambda i: (i, 0)),
        ),
        input_output_aliases={0: 0},
        compiler_params=pltpu.CompilerParams(
            # Pure mem-bound copy: megacore sharding buys nothing, keep the
            # grid as a plain sequential stream.
            dimension_semantics=("arbitrary",),
        ),
    )(x2d)
    return jnp.reshape(out2d, orig_shape)


if __name__ == "__main__":
    key = jax.random.PRNGKey(0)

    # Small demo shape consistent with the surrounding LLM code:
    # [batch, seq, emb_dim].
    batch, seq, emb_dim = 2, 8, 32
    x = jax.random.normal(key, (batch, seq, emb_dim), dtype=jnp.float32)

    out = dummy_transformer_block(x)
    out = jax.block_until_ready(out)
    assert out.shape == x.shape and out.dtype == x.dtype
    assert bool(jnp.array_equal(out, x))

    # Also exercise the streaming (multi-block grid) path at a modest shape by
    # forcing the small-input threshold / block budget down.
    x2 = jax.random.normal(key, (2, 64, 128), dtype=jnp.float32)
    out2 = dummy_transformer_block(x2, small_total_bytes=0,
                                   block_bytes=16 * 1024)
    out2 = jax.block_until_ready(out2)
    assert out2.shape == x2.shape and out2.dtype == x2.dtype
    assert bool(jnp.array_equal(out2, x2))

    print("KERNEL_OK")
</pallas_src>

<mosaic_0001>
module attributes {stable_mosaic.version = 11 : i64} {
  func.func @_identity_kernel(%arg0: memref<16x32xf32, #tpu.memory_space<vmem>>, %arg1: memref<16x32xf32, #tpu.memory_space<vmem>>) attributes {dimension_semantics = [], scalar_prefetch = 0 : i64, scratch_operands = 0 : i64, tpu.core_type = #tpu.core_type<tc>} {
    %c0 = arith.constant 0 : index
    %c0_0 = arith.constant 0 : index
    %0 = vector.load %arg0[%c0, %c0_0] : memref<16x32xf32, #tpu.memory_space<vmem>>, vector<16x32xf32>
    %c0_1 = arith.constant 0 : index
    %c0_2 = arith.constant 0 : index
    %1 = vector.load %arg1[%c0_1, %c0_2] : memref<16x32xf32, #tpu.memory_space<vmem>>, vector<16x32xf32>
    tpu.vector_store %arg1[%c0_1, %c0_2], %0 {strides = array<i32>} : memref<16x32xf32, #tpu.memory_space<vmem>>, vector<16x32xf32>,
    return
  }
}

</mosaic_0001>

<llo_original>
// kernel: tpu_custom_call.1
$region0: #{tpu_custom_call.1}
  #allocation0 [shape = 'u32[]', space=smem, size = 0x4, offset = 0x4, fixed_abs, tag = 'smem constant byte address 0x4 - core index']
  #allocation1 [shape = 'u32[144,128]{1,0:T(1,128)}', space=vmem, size = 0x12000, scoped, tag = 'internal scratch']
  %s0 = inlined_call_operand.hbm [shape: f32[16,32], index: 0, kind: input, shape index: {}, may-alias: {0,1}]
  %s1 = inlined_call_operand.hbm [shape: f32[16,32], index: 1, kind: output, shape index: {}, may-alias: {0,1}]
  %s2 = sld [smem:[#allocation0]]
  $region18: #{tpu_custom_call.1} parent=0
    _
  %s4 = ssub.s32 1, %s2
  %s5 = scalar_select 0, %s4, %s2
  $region1: #{tpu_custom_call.1} parent=0
    #allocation2 [shape = 'u8[8192]{0}', space=vmem, size = 0x2000, scoped, tag = 'input window, operand 0, single buffered']
    #allocation3 [shape = 's32[1]{0}', space=sflag, size = 0x4, scoped, tag = 'scoped memory for tpu_custom_call.1']
    #allocation4 [shape = 's32[1]{0}', space=sflag, size = 0x4, scoped, tag = 'scoped memory for tpu_custom_call.1']
    #allocation5 [shape = 'u8[8192]{0}', space=vmem, size = 0x2000, scoped, tag = 'output window, operand 0, single buffered']
    %6 = vsyncpa [#allocation3], 0
    %7 = vsyncpa [#allocation4], 0
    // Predicated region
    $region2: #{tpu_custom_call.1} parent=1 // pred_check
      _
    $region3: #{tpu_custom_call.1} parent=1 // pred_check_branch
      %9 = sbr.rel (0) target = $region5
    $region4: #{tpu_custom_call.1} parent=1 // pred_region
      %s11 = ssub.s32 256, 256
      %12 = vsyncadd [#allocation3], %s11
      %s13 = sshll.u32 [#allocation2], 4
      %s14 = int_to_ptr.vmem [resolvable:$true] %s13
      %19 = dma.hbm_to_vmem [thread:$0]  %s0, 256, %s14, [#allocation3], 128, 128, 8
    $region5: #{tpu_custom_call.1} parent=1 // pred_fallthru
      _
    // Predicated region
    $region6: #{tpu_custom_call.1} parent=1 // pred_check
      _
    $region7: #{tpu_custom_call.1} parent=1 // pred_check_branch
      %21 = sbr.rel (0) target = $region9
    $region8: #{tpu_custom_call.1} parent=1 // pred_region
      %22 = dma.done [#allocation3], 256
    $region9: #{tpu_custom_call.1} parent=1 // pred_fallthru
      _
    %v23 = vld [vmem:[#allocation2] sm:$0xff]
    %v24 = vld [vmem:[#allocation2 + $0x8] sm:$0xff]
    %vm25 = vcmask 261120
    %26 = vst.msk [vmem:[#allocation5] sm:$0xff] %vm25, %v23
    %27 = vst.msk [vmem:[#allocation5 + $0x8] sm:$0xff] %vm25, %v24
    // Predicated region
    $region10: #{tpu_custom_call.1} parent=1 // pred_check
      _
    $region11: #{tpu_custom_call.1} parent=1 // pred_check_branch
      %29 = sbr.rel (0) target = $region13
    $region12: #{tpu_custom_call.1} parent=1 // pred_region
      %s31 = ssub.s32 256, 256
      %32 = vsyncadd [#allocation4], %s31
      %s33 = sshll.u32 [#allocation5], 4
      %s34 = int_to_ptr.vmem [resolvable:$true] %s33
      %39 = dma.vmem_to_hbm [thread:$0]  %s34, 256, %s1, [#allocation4], 128, 128, 8
    $region13: #{tpu_custom_call.1} parent=1 // pred_fallthru
      _
    // Predicated region
    $region14: #{tpu_custom_call.1} parent=1 // pred_check
      _
    $region15: #{tpu_custom_call.1} parent=1 // pred_check_branch
      %41 = sbr.rel (0) target = $region17
    $region16: #{tpu_custom_call.1} parent=1 // pred_region
      %42 = dma.done [#allocation4], 256
    $region17: #{tpu_custom_call.1} parent=1 // pred_fallthru
      _
    %43 = vsyncpa [#allocation3], 1
    %44 = vsyncpa [#allocation4], 1

</llo_original>
